<compile_context>
chip_gen: v6e
topology: v6e:2x2x1
jax: 0.10.0
libtpu: 0.0.40
codegen_flags: <defaults>
</compile_context>

<pallas_src>
import math

import jax
import jax.numpy as jnp
from jax.experimental import pallas as pl
from jax.experimental.pallas import tpu as pltpu


def _add_pe_kernel(x_ref, pe_ref, o_ref):
    # x_ref/o_ref: (TB, S*D) tile of rows; pe_ref: (1, S*D), broadcast over TB.
    o_ref[...] = x_ref[...] + pe_ref[...]


def make_positional_encoding(d_model: int, max_len: int = 24) -> jnp.ndarray:
    """Build the (1, max_len, d_model) sinusoidal table exactly like PyTorch."""
    position = jnp.arange(max_len, dtype=jnp.float32)[:, None]            # (L, 1)
    div_term = jnp.exp(
        jnp.arange(0, d_model, 2, dtype=jnp.float32)
        * (-math.log(10000.0) / d_model)
    )                                                                      # (D/2,)
    angles = position * div_term                                           # (L, D/2)
    pe = jnp.zeros((max_len, d_model), dtype=jnp.float32)
    pe = pe.at[:, 0::2].set(jnp.sin(angles))
    pe = pe.at[:, 1::2].set(jnp.cos(angles))
    return pe[None]                                                        # (1, L, D)


def _vmem_budget_and_limit():
    """Derive (x/out buffer budget, scoped VMEM limit) from the local chip."""
    try:
        info = pltpu.get_tpu_info()
        cap = int(getattr(info, "vmem_capacity_bytes", 64 * 1024 * 1024))
    except Exception:
        cap = 64 * 1024 * 1024            # conservative fallback: v7x per-TC VMEM
    limit = (cap * 3) // 4                # headroom for pe block + bookkeeping
    budget = (limit * 2) // 3             # what the x-in/out double buffers may use
    # v5e/v6e (128 MiB): limit 96 MiB, budget 64 MiB.
    # v7x    ( 64 MiB): limit 48 MiB, budget 32 MiB.
    return budget, limit


def _pick_block_rows(n_rows: int, row_bytes: int, budget_bytes: int,
                     itemsize: int) -> int:
    """Rows per grid step.

    Goals:
      * x-in + out, each double-buffered, fit `budget_bytes`.
      * >= 2 (even) grid steps when the batch allows it, so v7x's two
        TensorCores both stream (near-neutral on single-TC v5e/v6e).
      * Second-to-last block dim is a dtype-aware sublane multiple
        (8 f32 / 16 bf16 / 32 int8-fp8) unless it is the full extent.
    """
    sublane = {4: 8, 2: 16, 1: 32}.get(itemsize, 8)
    tb_fit = max(1, budget_bytes // (4 * row_bytes))   # 2 streams x 2 buffers each
    if n_rows <= 1:
        return max(1, n_rows)

    n_steps = 2
    while True:
        tb = -(-n_rows // n_steps)                      # ceil(n_rows / n_steps)
        tb = -(-tb // sublane) * sublane                # round up to sublane multiple
        tb = min(n_rows, max(sublane, tb))              # full-extent fallback legal
        if tb <= tb_fit or tb <= sublane:
            return tb
        n_steps += 2                                    # keep step count even


def positional_encoding_forward(
    x: jnp.ndarray,
    pe_flat: jnp.ndarray,
    *,
    min_pallas_bytes: int = 1 << 20,
    force_pallas: bool = False,
    donate_x: bool = False,
) -> jnp.ndarray:
    """x: (B, S, D); pe_flat: (1, S*D) pre-cast to x.dtype.

    Returns x + pe[:, :S] (module default dropout p=0.0 -> identity).
    """
    B, S, D = x.shape
    SD = S * D
    itemsize = jnp.dtype(x.dtype).itemsize

    # Tiny-problem / fusion gate: in production call sites the plain add lets
    # XLA fuse it into a neighbouring op's epilogue, erasing the entire
    # read+write of x -- a bigger win than any in-kernel tuning.
    if not force_pallas and x.size * itemsize < min_pallas_bytes:
        return (x.reshape(B, SD) + pe_flat).reshape(B, S, D)

    x2d = x.reshape(B, SD)                                   # contiguous, free

    budget, vmem_limit = _vmem_budget_and_limit()
    tb = _pick_block_rows(B, SD * itemsize, budget, itemsize)
    grid = (pl.cdiv(B, tb),)

    out2d = pl.pallas_call(
        _add_pe_kernel,
        out_shape=jax.ShapeDtypeStruct((B, SD), x.dtype),
        grid_spec=pltpu.PrefetchScalarGridSpec(
            num_scalar_prefetch=0,
            grid=grid,
            in_specs=[
                # TB batch rows per grid step (lane-dense last dim = S*D),
                # default double-buffering (no pl.Buffered: kernel is BW-bound).
                pl.BlockSpec((tb, SD), lambda i: (i, 0)),
                # pe: constant block index -> resident in VMEM for all steps,
                # broadcast over TB rows inside the kernel.
                pl.BlockSpec((1, SD), lambda i: (0, 0)),
            ],
            out_specs=pl.BlockSpec((tb, SD), lambda i: (i, 0)),
        ),
        compiler_params=pltpu.CompilerParams(
            dimension_semantics=("parallel",),       # shard steps across v7x TCs
            vmem_limit_bytes=vmem_limit,
        ),
        # Footprint-only win (no bandwidth change): reuse x's HBM buffer for
        # the output when the caller no longer needs x.
        input_output_aliases=({0: 0} if donate_x else {}),
    )(x2d, pe_flat)

    return out2d.reshape(B, S, D)


class PositionalEncoding:
    """JAX/Pallas port of AnimateDiff's PositionalEncoding (dropout p=0.0)."""

    def __init__(self, d_model: int, dropout: float = 0.0, max_len: int = 24):
        if dropout != 0.0:
            # TODO(synk): training-mode dropout (p>0) needs pltpu.prng_* in-kernel.
            raise NotImplementedError("only dropout=0.0 (module default) supported")
        self.d_model = d_model
        self.max_len = max_len
        self.pe = make_positional_encoding(d_model, max_len)   # (1, L, D) f32
        self._pe_flat_cache = {}                                # keyed by (S, dtype)

    def pe_flat(self, S: int, dtype) -> jnp.ndarray:
        key = (int(S), jnp.dtype(dtype).name)
        if key not in self._pe_flat_cache:
            self._pe_flat_cache[key] = (
                self.pe[:, :S, :].reshape(1, S * self.d_model).astype(dtype)
            )
        return self._pe_flat_cache[key]

    def __call__(self, x: jnp.ndarray, **kwargs) -> jnp.ndarray:
        return positional_encoding_forward(
            x, self.pe_flat(x.shape[1], x.dtype), **kwargs
        )


if __name__ == "__main__":
    d_model = 32
    max_len = 24
    batch = 2
    seq = 8

    key = jax.random.PRNGKey(0)
    x = jax.random.normal(key, (batch, seq, d_model), dtype=jnp.float32)

    module = PositionalEncoding(d_model, max_len=max_len)

    # force_pallas=True so the demo exercises the kernel even at tiny size.
    out = module(x, force_pallas=True)
    out = jax.block_until_ready(out)

    # reference check in plain JAX
    ref = x + module.pe[:, :seq, :]
    assert out.shape == (batch, seq, d_model)
    assert jnp.allclose(out, ref, atol=1e-6), "mismatch vs reference"

    print("KERNEL_OK")
</pallas_src>

<mosaic_0001>
module attributes {stable_mosaic.version = 11 : i64} {
  func.func @_add_pe_kernel(%arg0: i32, %arg1: memref<2x256xf32, #tpu.memory_space<vmem>>, %arg2: memref<1x256xf32, #tpu.memory_space<vmem>>, %arg3: memref<2x256xf32, #tpu.memory_space<vmem>>) attributes {dimension_semantics = [#tpu.dimension_semantics<parallel>], iteration_bounds = array<i64: 1>, scalar_prefetch = 0 : i64, scratch_operands = 0 : i64, tpu.core_type = #tpu.core_type<tc>, window_params = [{transform_indices = @transform_0, window_bounds = array<i64: 2, 256>}, {pipeline_mode = #tpu.pipeline_mode<synchronous>, transform_indices = @transform_1, window_bounds = array<i64: 1, 256>}, {transform_indices = @transform_2, window_bounds = array<i64: 2, 256>}]} {
    %c0 = arith.constant 0 : index
    %c0_0 = arith.constant 0 : index
    %0 = vector.load %arg1[%c0, %c0_0] : memref<2x256xf32, #tpu.memory_space<vmem>>, vector<2x256xf32>
    %c0_1 = arith.constant 0 : index
    %c0_2 = arith.constant 0 : index
    %1 = vector.load %arg2[%c0_1, %c0_2] : memref<1x256xf32, #tpu.memory_space<vmem>>, vector<1x256xf32>
    %2 = vector.broadcast %1 : vector<1x256xf32> to vector<2x256xf32>
    %3 = arith.addf %0, %2 : vector<2x256xf32>
    %c0_3 = arith.constant 0 : index
    %c0_4 = arith.constant 0 : index
    %4 = vector.load %arg3[%c0_3, %c0_4] : memref<2x256xf32, #tpu.memory_space<vmem>>, vector<2x256xf32>
    tpu.vector_store %arg3[%c0_3, %c0_4], %3 {strides = array<i32>} : memref<2x256xf32, #tpu.memory_space<vmem>>, vector<2x256xf32>,
    return
  }
  func.func @transform_0(%arg0: i32) -> (i32, i32) {
    %c0_i32 = arith.constant 0 : i32
    %c0_i32_0 = arith.constant 0 : i32
    return %arg0, %c0_i32 : i32, i32
  }
  func.func @transform_1(%arg0: i32) -> (i32, i32) {
    %c0_i32 = arith.constant 0 : i32
    %c0_i32_0 = arith.constant 0 : i32
    %c0_i32_1 = arith.constant 0 : i32
    return %c0_i32, %c0_i32_0 : i32, i32
  }
  func.func @transform_2(%arg0: i32) -> (i32, i32) {
    %c0_i32 = arith.constant 0 : i32
    %c0_i32_0 = arith.constant 0 : i32
    return %arg0, %c0_i32 : i32, i32
  }
}

</mosaic_0001>

<llo_original>
// kernel: tpu_custom_call.1
$region0: #{tpu_custom_call.1}
  #allocation0 [shape = 'u32[]', space=smem, size = 0x4, offset = 0x4, fixed_abs, tag = 'smem constant byte address 0x4 - core index']
  #allocation1 [shape = 'u32[144,128]{1,0:T(1,128)}', space=vmem, size = 0x12000, scoped, tag = 'internal scratch']
  %s0 = inlined_call_operand.hbm [shape: f32[2,256], index: 0, kind: input, shape index: {}]
  %s1 = inlined_call_operand.hbm [shape: f32[1,256], index: 1, kind: input, shape index: {}]
  %s2 = inlined_call_operand.hbm [shape: f32[2,256], index: 2, kind: output, shape index: {}]
  %s3 = sld [smem:[#allocation0]]
  $region26: #{tpu_custom_call.1} parent=0
    _
  %s5 = ssub.s32 1, %s3
  %s6 = scalar_select 0, %s5, %s3
  $region1: #{tpu_custom_call.1} parent=0
    #allocation2 [shape = 'u8[2048]{0}', space=vmem, size = 0x800, scoped, tag = 'input window, operand 0, single buffered']
    #allocation3 [shape = 's32[1]{0}', space=sflag, size = 0x4, scoped, tag = 'scoped memory for tpu_custom_call.1']
    #allocation4 [shape = 's32[1]{0}', space=sflag, size = 0x4, scoped, tag = 'scoped memory for tpu_custom_call.1']
    #allocation5 [shape = 'u8[1024]{0}', space=vmem, size = 0x400, scoped, tag = 'input window, operand 1, single buffered']
    #allocation6 [shape = 's32[1]{0}', space=sflag, size = 0x4, scoped, tag = 'scoped memory for tpu_custom_call.1']
    #allocation7 [shape = 'u8[2048]{0}', space=vmem, size = 0x800, scoped, tag = 'output window, operand 0, single buffered']
    %7 = vsyncpa [#allocation3], 0
    %8 = vsyncpa [#allocation6], 0
    %9 = vsyncpa [#allocation4], 0
    // Predicated region
    $region2: #{tpu_custom_call.1} parent=1 // pred_check
      _
    $region3: #{tpu_custom_call.1} parent=1 // pred_check_branch
      %11 = sbr.rel (0) target = $region5
    $region4: #{tpu_custom_call.1} parent=1 // pred_region
      %s13 = ssub.s32 64, 64
      %14 = vsyncadd [#allocation3], %s13
      %s16 = sshll.u32 [#allocation2], 4
      %s17 = int_to_ptr.vmem [resolvable:$true] %s16
      %19 = dma.hbm_to_vmem [thread:$0]  %s0, 64, %s17, [#allocation3]
    $region5: #{tpu_custom_call.1} parent=1 // pred_fallthru
      _
    // Predicated region
    $region6: #{tpu_custom_call.1} parent=1 // pred_check
      _
    $region7: #{tpu_custom_call.1} parent=1 // pred_check_branch
      %21 = sbr.rel (0) target = $region9
    $region8: #{tpu_custom_call.1} parent=1 // pred_region
      %s23 = ssub.s32 32, 32
      %24 = vsyncadd [#allocation6], %s23
      %s26 = sshll.u32 [#allocation5], 4
      %s27 = int_to_ptr.vmem [resolvable:$true] %s26
      %29 = dma.hbm_to_vmem [thread:$0]  %s1, 32, %s27, [#allocation6]
    $region9: #{tpu_custom_call.1} parent=1 // pred_fallthru
      _
    // Predicated region
    $region10: #{tpu_custom_call.1} parent=1 // pred_check
      _
    $region11: #{tpu_custom_call.1} parent=1 // pred_check_branch
      %31 = sbr.rel (0) target = $region13
    $region12: #{tpu_custom_call.1} parent=1 // pred_region
      %32 = dma.done [#allocation3], 64
    $region13: #{tpu_custom_call.1} parent=1 // pred_fallthru
      _
    // Predicated region
    $region14: #{tpu_custom_call.1} parent=1 // pred_check
      _
    $region15: #{tpu_custom_call.1} parent=1 // pred_check_branch
      %34 = sbr.rel (0) target = $region17
    $region16: #{tpu_custom_call.1} parent=1 // pred_region
      %35 = dma.done [#allocation6], 32
    $region17: #{tpu_custom_call.1} parent=1 // pred_fallthru
      _
    %v36 = vld [vmem:[#allocation2] sm:$0xf]
    %v37 = vld [vmem:[#allocation5] sm:$0x3]
    %v39 = vlaneseq
    %v40 = vshrl.u32 %v39, 7
    %v41 = vsub.s32 0, %v40
    %v42 = vrot.slane %v37, %v41
    %v43 = vlaneseq
    %v44 = vshrl.u32 %v43, 7
    %v45 = vsub.s32 1, %v44
    %v46 = vrot.slane %v37, %v45
    %v47 = vcombine.low %v42, %v46
    %v49 = vunpack.c.l.s4 1983009808
    %v50 = vunpack.c.0.s8 %v49
    %v51 = vlaneseq
    %v52 = vshrl.u32 %v51, 7
    %v53 = vsub.s32 %v50, %v52
    %v54 = vrot.slane %v47, %v53
    %v56 = vadd.f32 %v36, %v54
    %57 = vst [vmem:[#allocation7] sm:$0xf] %v56
    // Predicated region
    $region18: #{tpu_custom_call.1} parent=1 // pred_check
      _
    $region19: #{tpu_custom_call.1} parent=1 // pred_check_branch
      %59 = sbr.rel (0) target = $region21
    $region20: #{tpu_custom_call.1} parent=1 // pred_region
      %s61 = ssub.s32 64, 64
      %62 = vsyncadd [#allocation4], %s61
      %s64 = sshll.u32 [#allocation7], 4
      %s65 = int_to_ptr.vmem [resolvable:$true] %s64
      %67 = dma.vmem_to_hbm [thread:$0]  %s65, 64, %s2, [#allocation4]
    $region21: #{tpu_custom_call.1} parent=1 // pred_fallthru
      _
    // Predicated region
    $region22: #{tpu_custom_call.1} parent=1 // pred_check
      _
    $region23: #{tpu_custom_call.1} parent=1 // pred_check_branch
      %69 = sbr.rel (0) target = $region25
    $region24: #{tpu_custom_call.1} parent=1 // pred_region
      %70 = dma.done [#allocation4], 64
    $region25: #{tpu_custom_call.1} parent=1 // pred_fallthru
      _
    %71 = vsyncpa [#allocation3], 1
    %72 = vsyncpa [#allocation6], 1
    %73 = vsyncpa [#allocation4], 1

</llo_original>
